<compile_context>
chip_gen: v6e
topology: v6e:2x2x1
jax: 0.10.0
libtpu: 0.0.40
codegen_flags: <defaults>
</compile_context>

<pallas_src>
import functools

import jax
import jax.numpy as jnp
from jax import lax
from jax.experimental import pallas as pl
from jax.experimental.pallas import tpu as pltpu

_VMEM_LIMIT_BYTES = 32 * 1024 * 1024     # requested scoped VMEM; within physical on v5e/v6e/v7x
_FUSED_VMEM_BYTES = 10 * 1024 * 1024     # conservative "z fits resident" threshold (v7x-safe)


# ---------------------------------------------------------------------------- kernels


def _fused_kernel(z_ref, w1bd_ref, b1_ref, w2_ref, o_ref, *, num_comp, d, hdim):
    """Small-z fast path: z resident in VMEM, beta and the output produced in one call."""
    n = z_ref.shape[0]
    z = z_ref[...].astype(jnp.float32)                                    # (N, M*D)
    h = jnp.tanh(jnp.dot(z, w1bd_ref[...],
                         preferred_element_type=jnp.float32) + b1_ref[...])  # (N, M*H)
    # mean over nodes, then elementwise W2 (tiled to (1, M*H)); per-component score = chunk sum.
    prod = (jnp.sum(h, axis=0, keepdims=True) * jnp.float32(1.0 / n)) * w2_ref[...]  # (1, M*H)
    scores = [jnp.sum(prod[:, m * hdim:(m + 1) * hdim], keepdims=True)     # each (1, 1)
              for m in range(num_comp)]
    smax = scores[0]
    for s in scores[1:]:
        smax = jnp.maximum(smax, s)
    exps = [jnp.exp(s - smax) for s in scores]
    denom = exps[0]
    for e in exps[1:]:
        denom = denom + e
    inv = 1.0 / denom                                                      # (1, 1)
    acc = z[:, 0:d] * (exps[0] * inv)
    for m in range(1, num_comp):
        acc = acc + z[:, m * d:(m + 1) * d] * (exps[m] * inv)
    o_ref[...] = acc.astype(o_ref.dtype)


def _score_kernel(z_ref, w1bd_ref, b1_ref, part_ref, *, n_total, block_n):
    """Per-tile partial sums of tanh(z @ W1bd + b1), pre-scaled by 1/N; tail rows masked."""
    i = pl.program_id(0)
    z = z_ref[...].astype(jnp.float32)                                     # (block_n, M*D)
    h = jnp.tanh(jnp.dot(z, w1bd_ref[...],
                         preferred_element_type=jnp.float32) + b1_ref[...])  # (block_n, M*H)
    rows = lax.broadcasted_iota(jnp.int32, h.shape, 0) + i * block_n
    h = jnp.where(rows < n_total, h, 0.0)                                  # mask padded tail rows
    part_ref[...] = jnp.sum(h, axis=0, keepdims=True) * jnp.float32(1.0 / n_total)


def _apply_kernel(beta_ref, z_ref, o_ref, *, num_comp, d):
    """out_tile = sum_m beta[m] * z_tile[:, m*D:(m+1)*D]; beta scalars read from SMEM."""
    acc = z_ref[:, 0:d].astype(jnp.float32) * beta_ref[0]
    for m in range(1, num_comp):
        acc = acc + z_ref[:, m * d:(m + 1) * d].astype(jnp.float32) * beta_ref[m]
    o_ref[...] = acc.astype(o_ref.dtype)


# ---------------------------------------------------------------------------- wrapper


def _pick_block_n(n_rows, bytes_per_row):
    """Largest row tile whose double-buffered working set fits the VMEM budget."""
    budget = int(_VMEM_LIMIT_BYTES * 0.6)
    max_rows = max(budget // max(2 * bytes_per_row, 1), 8)
    if n_rows <= max_rows:
        return n_rows                       # single full-extent tile (any size is legal)
    bn = min(max_rows, 2048)
    return max((bn // 8) * 8, 8)            # multiple of 8; tail tile handled by masking


def component_attention(z, w1, b1, w2, *, block_n=None, force_streaming=False):
    """z: [N, M, D]; w1: [D, H]; b1: [H]; w2: [H] (2nd Linear, no bias). Returns [N, D]."""
    n, num_comp, d = z.shape
    hdim = w1.shape[1]
    md, mh = num_comp * d, num_comp * hdim

    z2 = z.reshape(n, md)                                            # contiguous, lane-dense
    w1f = w1.astype(jnp.float32)
    w2f = w2.reshape(hdim).astype(jnp.float32)
    w1bd = jnp.kron(jnp.eye(num_comp, dtype=jnp.float32), w1f)       # (M*D, M*H) block-diagonal
    b1t = jnp.tile(b1.astype(jnp.float32).reshape(1, hdim), (1, num_comp))  # (1, M*H)

    z_item = jnp.dtype(z.dtype).itemsize
    o_item = z_item

    # -------- fused single-pass path for small z (reads z from HBM exactly once) --------
    fused_bytes = n * md * (z_item + 4) + n * mh * 4 + n * d * 4 + md * mh * 4
    if not force_streaming and fused_bytes <= _FUSED_VMEM_BYTES:
        w2t = jnp.tile(w2f.reshape(1, hdim), (1, num_comp))          # (1, M*H)
        return pl.pallas_call(
            functools.partial(_fused_kernel, num_comp=num_comp, d=d, hdim=hdim),
            out_shape=jax.ShapeDtypeStruct((n, d), z.dtype),
            grid=(1,),
            in_specs=[
                pl.BlockSpec((n, md), lambda i: (0, 0)),
                pl.BlockSpec((md, mh), lambda i: (0, 0)),
                pl.BlockSpec((1, mh), lambda i: (0, 0)),
                pl.BlockSpec((1, mh), lambda i: (0, 0)),
            ],
            out_specs=pl.BlockSpec((n, d), lambda i: (0, 0)),
            compiler_params=pltpu.CompilerParams(
                dimension_semantics=("arbitrary",),
                vmem_limit_bytes=_VMEM_LIMIT_BYTES),
            cost_estimate=pl.CostEstimate(
                flops=2 * n * md * mh + 2 * n * md,
                transcendentals=n * mh,
                bytes_accessed=n * md * z_item + n * d * o_item + md * mh * 4),
        )(z2, w1bd, b1t, w2t)

    # -------- streaming two-pass path --------
    if block_n is None:
        # z tile (input dtype) + its f32 upcast + h tile + output tile, double-buffered.
        bytes_per_row = md * (z_item + 4) + mh * 4 + d * 4
        block_n = _pick_block_n(n, bytes_per_row)
    block_n = int(block_n)
    num_blocks = -(-n // block_n)
    grid = (num_blocks,)

    # Pass 1: per-tile partial sums (parallel across grid / TensorCores), finalize in jnp.
    partials = pl.pallas_call(
        functools.partial(_score_kernel, n_total=n, block_n=block_n),
        out_shape=jax.ShapeDtypeStruct((num_blocks, mh), jnp.float32),
        grid=grid,
        in_specs=[
            pl.BlockSpec((block_n, md), lambda i: (i, 0)),           # z row tile (streamed)
            pl.BlockSpec((md, mh), lambda i: (0, 0)),                # block-diag W1 (resident)
            pl.BlockSpec((1, mh), lambda i: (0, 0)),                 # b1 tiled
        ],
        out_specs=pl.BlockSpec((1, mh), lambda i: (i, 0)),           # per-tile partial sums
        compiler_params=pltpu.CompilerParams(
            dimension_semantics=("parallel",),
            vmem_limit_bytes=_VMEM_LIMIT_BYTES),
        cost_estimate=pl.CostEstimate(
            flops=2 * n * md * mh,
            transcendentals=n * mh,
            bytes_accessed=n * md * z_item + md * mh * 4 + num_blocks * mh * 4),
    )(z2, w1bd, b1t)

    # O(M*H) finalization: partials are already scaled by 1/N, so summing gives the mean.
    h_mean = jnp.sum(partials, axis=0).reshape(num_comp, hdim)       # (M, H)
    scores = h_mean @ w2f                                            # (M,)
    beta = jax.nn.softmax(scores, axis=0).astype(jnp.float32)        # (M,)

    # Pass 2: weighted component sum; independent row tiles -> "parallel" (megacore on v7x).
    out = pl.pallas_call(
        functools.partial(_apply_kernel, num_comp=num_comp, d=d),
        out_shape=jax.ShapeDtypeStruct((n, d), z.dtype),
        grid=grid,
        in_specs=[
            pl.BlockSpec(memory_space=pltpu.MemorySpace.SMEM),       # beta -> SMEM scalars
            pl.BlockSpec((block_n, md), lambda i: (i, 0)),           # z row tile (streamed)
        ],
        out_specs=pl.BlockSpec((block_n, d), lambda i: (i, 0)),      # lane-dense output tile
        compiler_params=pltpu.CompilerParams(
            dimension_semantics=("parallel",),
            vmem_limit_bytes=_VMEM_LIMIT_BYTES),
        cost_estimate=pl.CostEstimate(
            flops=2 * n * md,
            transcendentals=0,
            bytes_accessed=n * md * z_item + n * d * o_item + num_comp * 4),
    )(beta, z2)
    return out


# ---------------------------------------------------------------------------- reference


def _reference(z, w1, b1, w2):
    h = jnp.tanh(jnp.einsum("nmd,dh->nmh", z, w1, precision="highest") + b1)   # (N, M, H)
    s = jnp.einsum("nmh,h->nm", h, w2, precision="highest")                    # (N, M)
    w = jnp.mean(s, axis=0)                                                    # (M,)
    beta = jax.nn.softmax(w, axis=0)                                           # (M,)
    return jnp.sum(z * beta[None, :, None], axis=1)                            # (N, D)


if __name__ == "__main__":
    key = jax.random.PRNGKey(0)
    kz, kw1, kb1, kw2 = jax.random.split(key, 4)

    # Small shapes: N nodes, M components (meta-paths), D = in_size, H = hidden_size.
    N, M, D, H = 256, 4, 128, 32
    z = jax.random.normal(kz, (N, M, D), dtype=jnp.float32)

    lim1 = (6.0 / (D + H)) ** 0.5
    w1 = jax.random.uniform(kw1, (D, H), minval=-lim1, maxval=lim1, dtype=jnp.float32)
    b1 = jax.random.uniform(kb1, (H,), minval=-0.05, maxval=0.05, dtype=jnp.float32)
    lim2 = (6.0 / (H + 1)) ** 0.5
    w2 = jax.random.uniform(kw2, (H,), minval=-lim2, maxval=lim2, dtype=jnp.float32)

    ref = _reference(z, w1, b1, w2)

    # 1) Fused single-pass path (z small enough to stay resident in VMEM).
    out_fused = component_attention(z, w1, b1, w2)
    jax.block_until_ready(out_fused)
    assert out_fused.shape == (N, D)
    assert jnp.allclose(out_fused, ref, atol=2e-3, rtol=2e-3), "fused path mismatch"

    # 2) Streaming two-pass path with a non-dividing tile (exercises tail-row masking,
    #    multi-step parallel grid, SMEM beta broadcast).
    out_stream = component_attention(z, w1, b1, w2, force_streaming=True, block_n=96)
    jax.block_until_ready(out_stream)
    assert jnp.allclose(out_stream, ref, atol=2e-3, rtol=2e-3), "streaming path mismatch"

    # 3) N not a multiple of 8 (dropped out-of-bounds writes in pass 2).
    z_odd = z[:250]
    ref_odd = _reference(z_odd, w1, b1, w2)
    out_odd = component_attention(z_odd, w1, b1, w2, force_streaming=True, block_n=64)
    jax.block_until_ready(out_odd)
    assert out_odd.shape == (250, D)
    assert jnp.allclose(out_odd, ref_odd, atol=2e-3, rtol=2e-3), "odd-N streaming mismatch"

    print("KERNEL_OK")
</pallas_src>

<mosaic_0001>
module attributes {stable_mosaic.version = 11 : i64} {
  func.func @_fused_kernel(%arg0: i32, %arg1: memref<256x512xf32, #tpu.memory_space<vmem>>, %arg2: memref<512x128xf32, #tpu.memory_space<vmem>>, %arg3: memref<1x128xf32, #tpu.memory_space<vmem>>, %arg4: memref<1x128xf32, #tpu.memory_space<vmem>>, %arg5: memref<256x128xf32, #tpu.memory_space<vmem>>) attributes {dimension_semantics = [#tpu.dimension_semantics<arbitrary>], iteration_bounds = array<i64: 1>, scalar_prefetch = 0 : i64, scratch_operands = 0 : i64, tpu.core_type = #tpu.core_type<tc>, window_params = [{pipeline_mode = #tpu.pipeline_mode<synchronous>, transform_indices = @transform_0, window_bounds = array<i64: 256, 512>}, {pipeline_mode = #tpu.pipeline_mode<synchronous>, transform_indices = @transform_1, window_bounds = array<i64: 512, 128>}, {pipeline_mode = #tpu.pipeline_mode<synchronous>, transform_indices = @transform_2, window_bounds = array<i64: 1, 128>}, {pipeline_mode = #tpu.pipeline_mode<synchronous>, transform_indices = @transform_3, window_bounds = array<i64: 1, 128>}, {pipeline_mode = #tpu.pipeline_mode<synchronous>, transform_indices = @transform_4, window_bounds = array<i64: 256, 128>}]} {
    %c0 = arith.constant 0 : index
    %c0_0 = arith.constant 0 : index
    %0 = vector.load %arg1[%c0, %c0_0] : memref<256x512xf32, #tpu.memory_space<vmem>>, vector<256x512xf32>
    %c0_1 = arith.constant 0 : index
    %c0_2 = arith.constant 0 : index
    %1 = vector.load %arg2[%c0_1, %c0_2] : memref<512x128xf32, #tpu.memory_space<vmem>>, vector<512x128xf32>
    %cst = arith.constant dense<0.000000e+00> : vector<256x128xf32>
    %2 = tpu.matmul %0, %1, %cst {dimension_numbers = #tpu.dot_dimension_numbers<[1], [0], [0], [1], [0, 0, 1, 1], [], []>} : vector<256x512xf32>, vector<512x128xf32>, vector<256x128xf32> -> vector<256x128xf32>
    %c0_3 = arith.constant 0 : index
    %c0_4 = arith.constant 0 : index
    %3 = vector.load %arg3[%c0_3, %c0_4] : memref<1x128xf32, #tpu.memory_space<vmem>>, vector<1x128xf32>
    %4 = vector.broadcast %3 : vector<1x128xf32> to vector<256x128xf32>
    %5 = arith.addf %2, %4 : vector<256x128xf32>
    %6 = math.tanh %5 : vector<256x128xf32>
    %cst_5 = arith.constant dense<0.000000e+00> : vector<128xf32>
    %7 = vector.multi_reduction <add>, %6, %cst_5 [0] : vector<256x128xf32> to vector<128xf32>
    %8 = vector.shape_cast %7 : vector<128xf32> to vector<1x128xf32>
    %cst_6 = arith.constant 3.906250e-03 : f32
    %9 = vector.broadcast %cst_6 : f32 to vector<1x128xf32>
    %10 = arith.mulf %8, %9 : vector<1x128xf32>
    %c0_7 = arith.constant 0 : index
    %c0_8 = arith.constant 0 : index
    %11 = vector.load %arg4[%c0_7, %c0_8] : memref<1x128xf32, #tpu.memory_space<vmem>>, vector<1x128xf32>
    %12 = arith.mulf %10, %11 : vector<1x128xf32>
    %13 = vector.extract_strided_slice %12 {offsets = [0, 0], sizes = [1, 32], strides = [1, 1]} : vector<1x128xf32> to vector<1x32xf32>
    %14 = vector.shape_cast %13 : vector<1x32xf32> to vector<1x1x32xf32>
    %cst_9 = arith.constant dense<0.000000e+00> : vector<1xf32>
    %15 = vector.multi_reduction <add>, %14, %cst_9 [1, 2] : vector<1x1x32xf32> to vector<1xf32>
    %16 = vector.shape_cast %15 : vector<1xf32> to vector<1x1x1xf32>
    %17 = vector.extract %16[0, 0, 0] : f32 from vector<1x1x1xf32>
    %18 = vector.broadcast %17 : f32 to vector<1x1xf32>
    %19 = vector.extract_strided_slice %12 {offsets = [0, 32], sizes = [1, 32], strides = [1, 1]} : vector<1x128xf32> to vector<1x32xf32>
    %20 = vector.shape_cast %19 : vector<1x32xf32> to vector<1x1x32xf32>
    %cst_10 = arith.constant dense<0.000000e+00> : vector<1xf32>
    %21 = vector.multi_reduction <add>, %20, %cst_10 [1, 2] : vector<1x1x32xf32> to vector<1xf32>
    %22 = vector.shape_cast %21 : vector<1xf32> to vector<1x1x1xf32>
    %23 = vector.extract %22[0, 0, 0] : f32 from vector<1x1x1xf32>
    %24 = vector.broadcast %23 : f32 to vector<1x1xf32>
    %25 = vector.extract_strided_slice %12 {offsets = [0, 64], sizes = [1, 32], strides = [1, 1]} : vector<1x128xf32> to vector<1x32xf32>
    %26 = vector.shape_cast %25 : vector<1x32xf32> to vector<1x1x32xf32>
    %cst_11 = arith.constant dense<0.000000e+00> : vector<1xf32>
    %27 = vector.multi_reduction <add>, %26, %cst_11 [1, 2] : vector<1x1x32xf32> to vector<1xf32>
    %28 = vector.shape_cast %27 : vector<1xf32> to vector<1x1x1xf32>
    %29 = vector.extract %28[0, 0, 0] : f32 from vector<1x1x1xf32>
    %30 = vector.broadcast %29 : f32 to vector<1x1xf32>
    %31 = vector.extract_strided_slice %12 {offsets = [0, 96], sizes = [1, 32], strides = [1, 1]} : vector<1x128xf32> to vector<1x32xf32>
    %32 = vector.shape_cast %31 : vector<1x32xf32> to vector<1x1x32xf32>
    %cst_12 = arith.constant dense<0.000000e+00> : vector<1xf32>
    %33 = vector.multi_reduction <add>, %32, %cst_12 [1, 2] : vector<1x1x32xf32> to vector<1xf32>
    %34 = vector.shape_cast %33 : vector<1xf32> to vector<1x1x1xf32>
    %35 = vector.extract %34[0, 0, 0] : f32 from vector<1x1x1xf32>
    %36 = vector.broadcast %35 : f32 to vector<1x1xf32>
    %37 = arith.maximumf %18, %24 : vector<1x1xf32>
    %38 = arith.maximumf %37, %30 : vector<1x1xf32>
    %39 = arith.maximumf %38, %36 : vector<1x1xf32>
    %40 = arith.subf %18, %39 : vector<1x1xf32>
    %41 = math.exp %40 : vector<1x1xf32>
    %42 = arith.subf %24, %39 : vector<1x1xf32>
    %43 = math.exp %42 : vector<1x1xf32>
    %44 = arith.subf %30, %39 : vector<1x1xf32>
    %45 = math.exp %44 : vector<1x1xf32>
    %46 = arith.subf %36, %39 : vector<1x1xf32>
    %47 = math.exp %46 : vector<1x1xf32>
    %48 = arith.addf %41, %43 : vector<1x1xf32>
    %49 = arith.addf %48, %45 : vector<1x1xf32>
    %50 = arith.addf %49, %47 : vector<1x1xf32>
    %cst_13 = arith.constant 1.000000e+00 : f32
    %51 = vector.broadcast %cst_13 : f32 to vector<1x1xf32>
    %52 = arith.divf %51, %50 : vector<1x1xf32>
    %53 = vector.extract_strided_slice %0 {offsets = [0, 0], sizes = [256, 128], strides = [1, 1]} : vector<256x512xf32> to vector<256x128xf32>
    %54 = arith.mulf %41, %52 : vector<1x1xf32>
    %55 = vector.broadcast %54 : vector<1x1xf32> to vector<256x128xf32>
    %56 = arith.mulf %53, %55 : vector<256x128xf32>
    %57 = vector.extract_strided_slice %0 {offsets = [0, 128], sizes = [256, 128], strides = [1, 1]} : vector<256x512xf32> to vector<256x128xf32>
    %58 = arith.mulf %43, %52 : vector<1x1xf32>
    %59 = vector.broadcast %58 : vector<1x1xf32> to vector<256x128xf32>
    %60 = arith.mulf %57, %59 : vector<256x128xf32>
    %61 = arith.addf %56, %60 : vector<256x128xf32>
    %62 = vector.extract_strided_slice %0 {offsets = [0, 256], sizes = [256, 128], strides = [1, 1]} : vector<256x512xf32> to vector<256x128xf32>
    %63 = arith.mulf %45, %52 : vector<1x1xf32>
    %64 = vector.broadcast %63 : vector<1x1xf32> to vector<256x128xf32>
    %65 = arith.mulf %62, %64 : vector<256x128xf32>
    %66 = arith.addf %61, %65 : vector<256x128xf32>
    %67 = vector.extract_strided_slice %0 {offsets = [0, 384], sizes = [256, 128], strides = [1, 1]} : vector<256x512xf32> to vector<256x128xf32>
    %68 = arith.mulf %47, %52 : vector<1x1xf32>
    %69 = vector.broadcast %68 : vector<1x1xf32> to vector<256x128xf32>
    %70 = arith.mulf %67, %69 : vector<256x128xf32>
    %71 = arith.addf %66, %70 : vector<256x128xf32>
    %c0_14 = arith.constant 0 : index
    %c0_15 = arith.constant 0 : index
    %72 = vector.load %arg5[%c0_14, %c0_15] : memref<256x128xf32, #tpu.memory_space<vmem>>, vector<256x128xf32>
    tpu.vector_store %arg5[%c0_14, %c0_15], %71 {strides = array<i32>} : memref<256x128xf32, #tpu.memory_space<vmem>>, vector<256x128xf32>,
    return
  }
  func.func @transform_0(%arg0: i32) -> (i32, i32) {
    %c0_i32 = arith.constant 0 : i32
    %c0_i32_0 = arith.constant 0 : i32
    %c0_i32_1 = arith.constant 0 : i32
    return %c0_i32, %c0_i32_0 : i32, i32
  }
  func.func @transform_1(%arg0: i32) -> (i32, i32) {
    %c0_i32 = arith.constant 0 : i32
    %c0_i32_0 = arith.constant 0 : i32
    %c0_i32_1 = arith.constant 0 : i32
    return %c0_i32, %c0_i32_0 : i32, i32
  }
  func.func @transform_2(%arg0: i32) -> (i32, i32) {
    %c0_i32 = arith.constant 0 : i32
    %c0_i32_0 = arith.constant 0 : i32
    %c0_i32_1 = arith.constant 0 : i32
    return %c0_i32, %c0_i32_0 : i32, i32
  }
  func.func @transform_3(%arg0: i32) -> (i32, i32) {
    %c0_i32 = arith.constant 0 : i32
    %c0_i32_0 = arith.constant 0 : i32
    %c0_i32_1 = arith.constant 0 : i32
    return %c0_i32, %c0_i32_0 : i32, i32
  }
  func.func @transform_4(%arg0: i32) -> (i32, i32) {
    %c0_i32 = arith.constant 0 : i32
    %c0_i32_0 = arith.constant 0 : i32
    %c0_i32_1 = arith.constant 0 : i32
    return %c0_i32, %c0_i32_0 : i32, i32
  }
}

</mosaic_0001>

<llo_original>
// kernel: tpu_custom_call.1
$region0: #{tpu_custom_call.1}
  #allocation0 [shape = 'u32[]', space=smem, size = 0x4, offset = 0x4, fixed_abs, tag = 'smem constant byte address 0x4 - core index']
  #allocation1 [shape = 'u32[144,128]{1,0:T(1,128)}', space=vmem, size = 0x12000, scoped, tag = 'internal scratch']
  %s0 = inlined_call_operand.hbm [shape: f32[256,512], index: 0, kind: input, shape index: {}]
  %s1 = inlined_call_operand.hbm [shape: f32[512,128], index: 1, kind: input, shape index: {}]
  %s2 = inlined_call_operand.vmem [shape: f32[1,128], index: 2, kind: input, shape index: {}]
  %s3 = inlined_call_operand.vmem [shape: f32[1,128], index: 3, kind: input, shape index: {}]
  %s4 = inlined_call_operand.hbm [shape: f32[256,128], index: 4, kind: output, shape index: {}]
  %s5 = sld [smem:[#allocation0]]
  $region34: #{tpu_custom_call.1} parent=0
    _
  %s7 = ssub.s32 1, %s5
  %s8 = scalar_select 0, %s7, %s5
  $region1: #{tpu_custom_call.1} parent=0
    #allocation2 [shape = 'u8[524288]{0}', space=vmem, size = 0x80000, scoped, tag = 'input window, operand 0, single buffered']
    #allocation3 [shape = 's32[1]{0}', space=sflag, size = 0x4, scoped, tag = 'scoped memory for tpu_custom_call.1']
    #allocation4 [shape = 's32[1]{0}', space=sflag, size = 0x4, scoped, tag = 'scoped memory for tpu_custom_call.1']
    #allocation5 [shape = 'u8[262144]{0}', space=vmem, size = 0x40000, scoped, tag = 'input window, operand 1, single buffered']
    #allocation6 [shape = 's32[1]{0}', space=sflag, size = 0x4, scoped, tag = 'scoped memory for tpu_custom_call.1']
    #allocation7 [shape = 'u8[131072]{0}', space=vmem, size = 0x20000, scoped, tag = 'output window, operand 0, single buffered']
    %9 = vsyncpa [#allocation3], 0
    %10 = vsyncpa [#allocation6], 0
    %11 = vsyncpa [#allocation4], 0
    // Predicated region
    $region2: #{tpu_custom_call.1} parent=1 // pred_check
      _
    $region3: #{tpu_custom_call.1} parent=1 // pred_check_branch
      %13 = sbr.rel (0) target = $region5
    $region4: #{tpu_custom_call.1} parent=1 // pred_region
      %s15 = ssub.s32 16384, 16384
      %16 = vsyncadd [#allocation3], %s15
      %s17 = sshll.u32 [#allocation2], 4
      %s18 = int_to_ptr.vmem [resolvable:$true] %s17
      %23 = dma.hbm_to_vmem [thread:$0]  %s0, 16384, %s18, [#allocation3], 512, 512, 32
    $region5: #{tpu_custom_call.1} parent=1 // pred_fallthru
      _
    // Predicated region
    $region6: #{tpu_custom_call.1} parent=1 // pred_check
      _
    $region7: #{tpu_custom_call.1} parent=1 // pred_check_branch
      %25 = sbr.rel (0) target = $region9
    $region8: #{tpu_custom_call.1} parent=1 // pred_region
      %s27 = ssub.s32 8192, 8192
      %28 = vsyncadd [#allocation6], %s27
      %s29 = sshll.u32 [#allocation5], 4
      %s30 = int_to_ptr.vmem [resolvable:$true] %s29
      %35 = dma.hbm_to_vmem [thread:$0]  %s1, 8192, %s30, [#allocation6], 128, 128, 8
    $region9: #{tpu_custom_call.1} parent=1 // pred_fallthru
      _
    // Predicated region
    $region10: #{tpu_custom_call.1} parent=1 // pred_check
      _
    $region11: #{tpu_custom_call.1} parent=1 // pred_check_branch
      %37 = sbr.rel (0) target = $region13
    $region12: #{tpu_custom_call.1} parent=1 // pred_region
      _
    $region13: #{tpu_custom_call.1} parent=1 // pred_fallthru
      _
    // Predicated region
    $region14: #{tpu_custom_call.1} parent=1 // pred_check
      _
    $region15: #{tpu_custom_call.1} parent=1 // pred_check_branch
      %39 = sbr.rel (0) target = $region17
    $region16: #{tpu_custom_call.1} parent=1 // pred_region
      _
    $region17: #{tpu_custom_call.1} parent=1 // pred_fallthru
      _
    // Predicated region
    $region18: #{tpu_custom_call.1} parent=1 // pred_check
      _
    $region19: #{tpu_custom_call.1} parent=1 // pred_check_branch
      %41 = sbr.rel (0) target = $region21
    $region20: #{tpu_custom_call.1} parent=1 // pred_region
      %42 = dma.done [#allocation3], 16384
    $region21: #{tpu_custom_call.1} parent=1 // pred_fallthru
      _
    // Predicated region
    $region22: #{tpu_custom_call.1} parent=1 // pred_check
      _
    $region23: #{tpu_custom_call.1} parent=1 // pred_check_branch
      %44 = sbr.rel (0) target = $region25
    $region24: #{tpu_custom_call.1} parent=1 // pred_region
      %45 = dma.done [#allocation6], 8192
    $region25: #{tpu_custom_call.1} parent=1 // pred_fallthru
      _
    %v46 = vld [vmem:[#allocation2] sm:$0xff]
    %v47 = vld [vmem:[#allocation2 + $0x8] sm:$0xff]
    %v48 = vld [vmem:[#allocation2 + $0x10] sm:$0xff]
    %v49 = vld [vmem:[#allocation2 + $0x18] sm:$0xff]
    %v50 = vld [vmem:[#allocation2 + $0x20] sm:$0xff]
    %v51 = vld [vmem:[#allocation2 + $0x28] sm:$0xff]
    %v52 = vld [vmem:[#allocation2 + $0x30] sm:$0xff]
    %v53 = vld [vmem:[#allocation2 + $0x38] sm:$0xff]
    %v54 = vld [vmem:[#allocation2 + $0x40] sm:$0xff]
    %v55 = vld [vmem:[#allocation2 + $0x48] sm:$0xff]
    %v56 = vld [vmem:[#allocation2 + $0x50] sm:$0xff]
    %v57 = vld [vmem:[#allocation2 + $0x58] sm:$0xff]
    %v58 = vld [vmem:[#allocation2 + $0x60] sm:$0xff]
    %v59 = vld [vmem:[#allocation2 + $0x68] sm:$0xff]
    %v60 = vld [vmem:[#allocation2 + $0x70] sm:$0xff]
    %v61 = vld [vmem:[#allocation2 + $0x78] sm:$0xff]
    %v62 = vld [vmem:[#allocation2 + $0x80] sm:$0xff]
    %v63 = vld [vmem:[#allocation2 + $0x88] sm:$0xff]
    %v64 = vld [vmem:[#allocation2 + $0x90] sm:$0xff]
    %v65 = vld [vmem:[#allocation2 + $0x98] sm:$0xff]
    %v66 = vld [vmem:[#allocation2 + $0xa0] sm:$0xff]
    %v67 = vld [vmem:[#allocation2 + $0xa8] sm:$0xff]
    %v68 = vld [vmem:[#allocation2 + $0xb0] sm:$0xff]
    %v69 = vld [vmem:[#allocation2 + $0xb8] sm:$0xff]
    %v70 = vld [vmem:[#allocation2 + $0xc0] sm:$0xff]
    %v71 = vld [vmem:[#allocation2 + $0xc8] sm:$0xff]
    %v72 = vld [vmem:[#allocation2 + $0xd0] sm:$0xff]
    %v73 = vld [vmem:[#allocation2 + $0xd8] sm:$0xff]
    %v74 = vld [vmem:[#allocation2 + $0xe0] sm:$0xff]
    %v75 = vld [vmem:[#allocation2 + $0xe8] sm:$0xff]
    %v76 = vld [vmem:[#allocation2 + $0xf0] sm:$0xff]
    %v77 = vld [vmem:[#allocation2 + $0xf8] sm:$0xff]
    %v78 = vld [vmem:[#allocation2 + $0x100] sm:$0xff]
    %v79 = vld [vmem:[#allocation2 + $0x108] sm:$0xff]
    %v80 = vld [vmem:[#allocation2 + $0x110] sm:$0xff]
    %v81 = vld [vmem:[#allocation2 + $0x118] sm:$0xff]
    %v82 = vld [vmem:[#allocation2 + $0x120] sm:$0xff]
    %v83 = vld [vmem:[#allocation2 + $0x128] sm:$0xff]
    %v84 = vld [vmem:[#allocation2 + $0x130] sm:$0xff]
    %v85 = vld [vmem:[#allocation2 + $0x138] sm:$0xff]
    %v86 = vld [vmem:[#allocation2 + $0x140] sm:$0xff]
    %v87 = vld [vmem:[#allocation2 + $0x148] sm:$0xff]
    %v88 = vld [vmem:[#allocation2 + $0x150] sm:$0xff]
    %v89 = vld [vmem:[#allocation2 + $0x158] sm:$0xff]
    %v90 = vld [vmem:[#allocation2 + $0x160] sm:$0xff]
    %v91 = vld [vmem:[#allocation2 + $0x168] sm:$0xff]
    %v92 = vld [vmem:[#allocation2 + $0x170] sm:$0xff]
    %v93 = vld [vmem:[#allocation2 + $0x178] sm:$0xff]
    %v94 = vld [vmem:[#allocation2 + $0x180] sm:$0xff]
    %v95 = vld [vmem:[#allocation2 + $0x188] sm:$0xff]
    %v96 = vld [vmem:[#allocation2 + $0x190] sm:$0xff]
    %v97 = vld [vmem:[#allocation2 + $0x198] sm:$0xff]
    %v98 = vld [vmem:[#allocation2 + $0x1a0] sm:$0xff]
    %v99 = vld [vmem:[#allocation2 + $0x1a8] sm:$0xff]
    %v100 = vld [vmem:[#allocation2 + $0x1b0] sm:$0xff]
    %v101 = vld [vmem:[#allocation2 + $0x1b8] sm:$0xff]
    %v102 = vld [vmem:[#allocation2 + $0x1c0] sm:$0xff]
    %v103 = vld [vmem:[#allocation2 + $0x1c8] sm:$0xff]
    %v104 = vld [vmem:[#allocation2 + $0x1d0] sm:$0xff]
    %v105 = vld [vmem:[#allocation2 + $0x1d8] sm:$0xff]
    %v106 = vld [vmem:[#allocation2 + $0x1e0] sm:$0xff]
    %v107 = vld [vmem:[#allocation2 + $0x1e8] sm:$0xff]
    %v108 = vld [vmem:[#allocation2 + $0x1f0] sm:$0xff]
    %v109 = vld [vmem:[#allocation2 + $0x1f8] sm:$0xff]
    %v110 = vld [vmem:[#allocation2 + $0x200] sm:$0xff]
    %v111 = vld [vmem:[#allocation2 + $0x208] sm:$0xff]
    %v112 = vld [vmem:[#allocation2 + $0x210] sm:$0xff]
    %v113 = vld [vmem:[#allocation2 + $0x218] sm:$0xff]
    %v114 = vld [vmem:[#allocation2 + $0x220] sm:$0xff]
    %v115 = vld [vmem:[#allocation2 + $0x228] sm:$0xff]
    %v116 = vld [vmem:[#allocation2 + $0x230] sm:$0xff]
    %v117 = vld [vmem:[#allocation2 + $0x238] sm:$0xff]
    %v118 = vld [vmem:[#allocation2 + $0x240] sm:$0xff]
    %v119 = vld [vmem:[#allocation2 + $0x248] sm:$0xff]
    %v120 = vld [vmem:[#allocation2 + $0x250] sm:$0xff]
    %v121 = vld [vmem:[#allocation2 + $0x258] sm:$0xff]
    %v122 = vld [vmem:[#allocation2 + $0x260] sm:$0xff]
    %v123 = vld [vmem:[#allocation2 + $0x268] sm:$0xff]
    %v124 = vld [vmem:[#allocation2 + $0x270] sm:$0xff]
    %v125 = vld [vmem:[#allocation2 + $0x278] sm:$0xff]
    %v126 = vld [vmem:[#allocation2 + $0x280] sm:$0xff]
    %v127 = vld [vmem:[#allocation2 + $0x288] sm:$0xff]
    %v128 = vld [vmem:[#allocation2 + $0x290] sm:$0xff]
    %v129 = vld [vmem:[#allocation2 + $0x298] sm:$0xff]
    %v130 = vld [vmem:[#allocation2 + $0x2a0] sm:$0xff]
    %v131 = vld [vmem:[#allocation2 + $0x2a8] sm:$0xff]
    %v132 = vld [vmem:[#allocation2 + $0x2b0] sm:$0xff]
    %v133 = vld [vmem:[#allocation2 + $0x2b8] sm:$0xff]
    %v134 = vld [vmem:[#allocation2 + $0x2c0] sm:$0xff]
    %v135 = vld [vmem:[#allocation2 + $0x2c8] sm:$0xff]
    %v136 = vld [vmem:[#allocation2 + $0x2d0] sm:$0xff]
    %v137 = vld [vmem:[#allocation2 + $0x2d8] sm:$0xff]
    %v138 = vld [vmem:[#allocation2 + $0x2e0] sm:$0xff]
    %v139 = vld [vmem:[#allocation2 + $0x2e8] sm:$0xff]
    %v140 = vld [vmem:[#allocation2 + $0x2f0] sm:$0xff]
    %v141 = vld [vmem:[#allocation2 + $0x2f8] sm:$0xff]
    %v142 = vld [vmem:[#allocation2 + $0x300] sm:$0xff]
    %v143 = vld [vmem:[#allocation2 + $0x308] sm:$0xff]
    %v144 = vld [vmem:[#allocation2 + $0x310] sm:$0xff]
    %v145 = vld [vmem:[#allocation2 + $0x318] sm:$0xff]
    %v146 = vld [vmem:[#allocation2 + $0x320] sm:$0xff]
    %v147 = vld [vmem:[#allocation2 + $0x328] sm:$0xff]
    %v148 = vld [vmem:[#allocation2 + $0x330] sm:$0xff]
    %v149 = vld [vmem:[#allocation2 + $0x338] sm:$0xff]
    %v150 = vld [vmem:[#allocation2 + $0x340] sm:$0xff]
    %v151 = vld [vmem:[#allocation2 + $0x348] sm:$0xff]
    %v152 = vld [vmem:[#allocation2 + $0x350] sm:$0xff]
    %v153 = vld [vmem:[#allocation2 + $0x358] sm:$0xff]
    %v154 = vld [vmem:[#allocation2 + $0x360] sm:$0xff]
    %v155 = vld [vmem:[#allocation2 + $0x368] sm:$0xff]
    %v156 = vld [vmem:[#allocation2 + $0x370] sm:$0xff]
    %v157 = vld [vmem:[#allocation2 + $0x378] sm:$0xff]
    %v158 = vld [vmem:[#allocation2 + $0x380] sm:$0xff]
    %v159 = vld [vmem:[#allocation2 + $0x388] sm:$0xff]
    %v160 = vld [vmem:[#allocation2 + $0x390] sm:$0xff]
    %v161 = vld [vmem:[#allocation2 + $0x398] sm:$0xff]
    %v162 = vld [vmem:[#allocation2 + $0x3a0] sm:$0xff]
    %v163 = vld [vmem:[#allocation2 + $0x3a8] sm:$0xff]
    %v164 = vld [vmem:[#allocation2 + $0x3b0] sm:$0xff]
    %v165 = vld [vmem:[#allocation2 + $0x3b8] sm:$0xff]
    %v166 = vld [vmem:[#allocation2 + $0x3c0] sm:$0xff]
    %v167 = vld [vmem:[#allocation2 + $0x3c8] sm:$0xff]
    %v168 = vld [vmem:[#allocation2 + $0x3d0] sm:$0xff]
    %v169 = vld [vmem:[#allocation2 + $0x3d8] sm:$0xff]
    %v170 = vld [vmem:[#allocation2 + $0x3e0] sm:$0xff]
    %v171 = vld [vmem:[#allocation2 + $0x3e8] sm:$0xff]
    %v172 = vld [vmem:[#allocation2 + $0x3f0] sm:$0xff]
    %v173 = vld [vmem:[#allocation2 + $0x3f8] sm:$0xff]
    %v174 = vld [vmem:[#allocation5] sm:$0xff]
    %v175 = vld [vmem:[#allocation5 + $0x8] sm:$0xff]
    %v176 = vld [vmem:[#allocation5 + $0x10] sm:$0xff]
    %v177 = vld [vmem:[#allocation5 + $0x18] sm:$0xff]
    %v178 = vld [vmem:[#allocation5 + $0x20] sm:$0xff]
    %v179 = vld [vmem:[#allocation5 + $0x28] sm:$0xff]
    %v180 = vld [vmem:[#allocation5 + $0x30] sm:$0xff]
    %v181 = vld [vmem:[#allocation5 + $0x38] sm:$0xff]
    %v182 = vld [vmem:[#allocation5 + $0x40] sm:$0xff]
    %v183 = vld [vmem:[#allocation5 + $0x48] sm:$0xff]
    %v184 = vld [vmem:[#allocation5 + $0x50] sm:$0xff]
    %v185 = vld [vmem:[#allocation5 + $0x58] sm:$0xff]
    %v186 = vld [vmem:[#allocation5 + $0x60] sm:$0xff]
    %v187 = vld [vmem:[#allocation5 + $0x68] sm:$0xff]
    %v188 = vld [vmem:[#allocation5 + $0x70] sm:$0xff]
    %v189 = vld [vmem:[#allocation5 + $0x78] sm:$0xff]
    %v190 = vld [vmem:[#allocation5 + $0x80] sm:$0xff]
    %v191 = vld [vmem:[#allocation5 + $0x88] sm:$0xff]
    %v192 = vld [vmem:[#allocation5 + $0x90] sm:$0xff]
    %v193 = vld [vmem:[#allocation5 + $0x98] sm:$0xff]
    %v194 = vld [vmem:[#allocation5 + $0xa0] sm:$0xff]
    %v195 = vld [vmem:[#allocation5 + $0xa8] sm:$0xff]
    %v196 = vld [vmem:[#allocation5 + $0xb0] sm:$0xff]
    %v197 = vld [vmem:[#allocation5 + $0xb8] sm:$0xff]
    %v198 = vld [vmem:[#allocation5 + $0xc0] sm:$0xff]
    %v199 = vld [vmem:[#allocation5 + $0xc8] sm:$0xff]
    %v200 = vld [vmem:[#allocation5 + $0xd0] sm:$0xff]
    %v201 = vld [vmem:[#allocation5 + $0xd8] sm:$0xff]
    %v202 = vld [vmem:[#allocation5 + $0xe0] sm:$0xff]
    %v203 = vld [vmem:[#allocation5 + $0xe8] sm:$0xff]
    %v204 = vld [vmem:[#allocation5 + $0xf0] sm:$0xff]
    %v205 = vld [vmem:[#allocation5 + $0xf8] sm:$0xff]
    %v206 = vld [vmem:[#allocation5 + $0x100] sm:$0xff]
    %v207 = vld [vmem:[#allocation5 + $0x108] sm:$0xff]
    %v208 = vld [vmem:[#allocation5 + $0x110] sm:$0xff]
    %v209 = vld [vmem:[#allocation5 + $0x118] sm:$0xff]
    %v210 = vld [vmem:[#allocation5 + $0x120] sm:$0xff]
    %v211 = vld [vmem:[#allocation5 + $0x128] sm:$0xff]
    %v212 = vld [vmem:[#allocation5 + $0x130] sm:$0xff]
    %v213 = vld [vmem:[#allocation5 + $0x138] sm:$0xff]
    %v214 = vld [vmem:[#allocation5 + $0x140] sm:$0xff]
    %v215 = vld [vmem:[#allocation5 + $0x148] sm:$0xff]
    %v216 = vld [vmem:[#allocation5 + $0x150] sm:$0xff]
    %v217 = vld [vmem:[#allocation5 + $0x158] sm:$0xff]
    %v218 = vld [vmem:[#allocation5 + $0x160] sm:$0xff]
    %v219 = vld [vmem:[#allocation5 + $0x168] sm:$0xff]
    %v220 = vld [vmem:[#allocation5 + $0x170] sm:$0xff]
    %v221 = vld [vmem:[#allocation5 + $0x178] sm:$0xff]
    %v222 = vld [vmem:[#allocation5 + $0x180] sm:$0xff]
    %v223 = vld [vmem:[#allocation5 + $0x188] sm:$0xff]
    %v224 = vld [vmem:[#allocation5 + $0x190] sm:$0xff]
    %v225 = vld [vmem:[#allocation5 + $0x198] sm:$0xff]
    %v226 = vld [vmem:[#allocation5 + $0x1a0] sm:$0xff]
    %v227 = vld [vmem:[#allocation5 + $0x1a8] sm:$0xff]
    %v228 = vld [vmem:[#allocation5 + $0x1b0] sm:$0xff]
    %v229 = vld [vmem:[#allocation5 + $0x1b8] sm:$0xff]
    %v230 = vld [vmem:[#allocation5 + $0x1c0] sm:$0xff]
    %v231 = vld [vmem:[#allocation5 + $0x1c8] sm:$0xff]
    %v232 = vld [vmem:[#allocation5 + $0x1d0] sm:$0xff]
    %v233 = vld [vmem:[#allocation5 + $0x1d8] sm:$0xff]
    %v234 = vld [vmem:[#allocation5 + $0x1e0] sm:$0xff]
    %v235 = vld [vmem:[#allocation5 + $0x1e8] sm:$0xff]
    %v236 = vld [vmem:[#allocation5 + $0x1f0] sm:$0xff]
    %v237 = vld [vmem:[#allocation5 + $0x1f8] sm:$0xff]
    %v238 = vld [vmem:[%s2] sm:$0x1]
    %v240 = vlaneseq
    %v241 = vshrl.u32 %v240, 7
    %v242 = vsub.s32 0, %v241
    %v243 = vrot.slane %v238, %v242
    %245 = vmatprep.subr.mxu0 0.0
    %246 = vmatpush1.msra.mxu0 %v189
    %247 = vmatprep.subr.mxu0 0.0
    %248 = vmatpush1.msra.mxu0 %v188
    %249 = vmatprep.subr.mxu0 0.0
    %250 = vmatpush1.msra.mxu0 %v187
    %251 = vmatprep.subr.mxu0 0.0
    %252 = vmatpush1.msra.mxu0 %v186
    %253 = vmatprep.subr.mxu0 0.0
    %254 = vmatpush1.msra.mxu0 %v185
    %255 = vmatprep.subr.mxu0 0.0
    %256 = vmatpush1.msra.mxu0 %v184
    %257 = vmatprep.subr.mxu0 0.0
    %258 = vmatpush1.msra.mxu0 %v183
    %259 = vmatprep.subr.mxu0 0.0
    %260 = vmatpush1.msra.mxu0 %v182
    %261 = vmatprep.subr.mxu0 0.0
    %262 = vmatpush1.msra.mxu0 %v181
    %263 = vmatprep.subr.mxu0 0.0
    %264 = vmatpush1.msra.mxu0 %v180
    %265 = vmatprep.subr.mxu0 0.0
    %266 = vmatpush1.msra.mxu0 %v179
    %267 = vmatprep.subr.mxu0 0.0
    %268 = vmatpush1.msra.mxu0 %v178
    %269 = vmatprep.subr.mxu0 0.0
    %270 = vmatpush1.msra.mxu0 %v177
    %271 = vmatprep.subr.mxu0 0.0
    %272 = vmatpush1.msra.mxu0 %v176
    %273 = vmatprep.subr.mxu0 0.0
    %274 = vmatpush1.msra.mxu0 %v175
    %275 = vmatprep.subr.mxu0 0.0
    %276 = vmatpush1.msra.mxu0 %v174
    %277 = vmatprep.subr.mxu0 0.0
    %278 = vmatpush2.msra.mxu0 %v205
    %279 = vmatprep.subr.mxu0 0.0
    %280 = vmatpush2.msra.mxu0 %v204
    %281 = vmatprep.subr.mxu0 0.0
    %282 = vmatpush2.msra.mxu0 %v203
    %283 = vmatprep.subr.mxu0 0.0
    %284 = vmatpush2.msra.mxu0 %v202
    %285 = vmatprep.subr.mxu0 0.0
    %286 = vmatpush2.msra.mxu0 %v201
    %287 = vmatprep.subr.mxu0 0.0
    %288 = vmatpush2.msra.mxu0 %v200
    %289 = vmatprep.subr.mxu0 0.0
    %290 = vmatpush2.msra.mxu0 %v199
    %291 = vmatprep.subr.mxu0 0.0
    %292 = vmatpush2.msra.mxu0 %v198
    %293 = vmatprep.subr.mxu0 0.0
    %294 = vmatpush2.msra.mxu0 %v197
    %295 = vmatprep.subr.mxu0 0.0
    %296 = vmatpush2.msra.mxu0 %v196
    %297 = vmatprep.subr.mxu0 0.0
    %298 = vmatpush2.msra.mxu0 %v195
    %299 = vmatprep.subr.mxu0 0.0
    %300 = vmatpush2.msra.mxu0 %v194
    %301 = vmatprep.subr.mxu0 0.0
    %302 = vmatpush2.msra.mxu0 %v193
    %303 = vmatprep.subr.mxu0 0.0
    %304 = vmatpush2.msra.mxu0 %v192
    %305 = vmatprep.subr.mxu0 0.0
    %306 = vmatpush2.msra.mxu0 %v191
    %307 = vmatprep.subr.mxu0 0.0
    %308 = vmatpush2.msra.mxu0 %v190
    %309 = vmatprep.mubr.f32.mxu0 %v47
    %310 = vmatmul.mubr.f32.gmra.mxu0 %v46
    %v311 = vpop.f32.mrf.mxu0
    %v312 = vadd.f32 %v243, %v311
    %v313 = vpop.f32.mrf.mxu0
    %314 = vmatprep.mubr.f32.mxu0 %v51
    %315 = vmatmul.mubr.f32.gmra.mxu0 %v50
    %v316 = vpop.f32.mrf.mxu0
    %v317 = vadd.f32 %v243, %v316
    %v318 = vpop.f32.mrf.mxu0
    %319 = vmatprep.mubr.f32.mxu0 %v55
    %320 = vmatmul.mubr.f32.gmra.mxu0 %v54
    %v321 = vpop.f32.mrf.mxu0
    %v322 = vadd.f32 %v243, %v321
    %v323 = vpop.f32.mrf.mxu0
    %324 = vmatprep.mubr.f32.mxu0 %v59
    %325 = vmatmul.mubr.f32.gmra.mxu0 %v58
    %v326 = vpop.f32.mrf.mxu0
    %v327 = vadd.f32 %v243, %v326
    %v328 = vpop.f32.mrf.mxu0
    %329 = vmatprep.mubr.f32.mxu0 %v63
    %330 = vmatmul.mubr.f32.gmra.mxu0 %v62
    %v331 = vpop.f32.mrf.mxu0
    %v332 = vadd.f32 %v243, %v331
    %v333 = vpop.f32.mrf.mxu0
    %334 = vmatprep.mubr.f32.mxu0 %v67
    %335 = vmatmul.mubr.f32.gmra.mxu0 %v66
    %v336 = vpop.f32.mrf.mxu0
    %v337 = vadd.f32 %v243, %v336
    %v338 = vpop.f32.mrf.mxu0
    %339 = vmatprep.mubr.f32.mxu0 %v71
    %340 = vmatmul.mubr.f32.gmra.mxu0 %v70
    %v341 = vpop.f32.mrf.mxu0
    %v342 = vadd.f32 %v243, %v341
    %v343 = vpop.f32.mrf.mxu0
    %344 = vmatprep.mubr.f32.mxu0 %v75
    %345 = vmatmul.mubr.f32.gmra.mxu0 %v74
    %v346 = vpop.f32.mrf.mxu0
    %v347 = vadd.f32 %v243, %v346
    %v348 = vpop.f32.mrf.mxu0
    %349 = vmatprep.mubr.f32.mxu0 %v79
    %350 = vmatmul.mubr.f32.gmra.mxu0 %v78
    %v351 = vpop.f32.mrf.mxu0
    %v352 = vadd.f32 %v243, %v351
    %v353 = vpop.f32.mrf.mxu0
    %354 = vmatprep.mubr.f32.mxu0 %v83
    %355 = vmatmul.mubr.f32.gmra.mxu0 %v82
    %v356 = vpop.f32.mrf.mxu0
    %v357 = vadd.f32 %v243, %v356
    %v358 = vpop.f32.mrf.mxu0
    %359 = vmatprep.mubr.f32.mxu0 %v87
    %360 = vmatmul.mubr.f32.gmra.mxu0 %v86
    %v361 = vpop.f32.mrf.mxu0
    %v362 = vadd.f32 %v243, %v361
    %v363 = vpop.f32.mrf.mxu0
    %364 = vmatprep.mubr.f32.mxu0 %v91
    %365 = vmatmul.mubr.f32.gmra.mxu0 %v90
    %v366 = vpop.f32.mrf.mxu0
    %v367 = vadd.f32 %v243, %v366
    %v368 = vpop.f32.mrf.mxu0
    %369 = vmatprep.mubr.f32.mxu0 %v95
    %370 = vmatmul.mubr.f32.gmra.mxu0 %v94
    %v371 = vpop.f32.mrf.mxu0
    %v372 = vadd.f32 %v243, %v371
    %v373 = vpop.f32.mrf.mxu0
    %374 = vmatprep.mubr.f32.mxu0 %v99
    %375 = vmatmul.mubr.f32.gmra.mxu0 %v98
    %v376 = vpop.f32.mrf.mxu0
    %v377 = vadd.f32 %v243, %v376
    %v378 = vpop.f32.mrf.mxu0
    %379 = vmatprep.mubr.f32.mxu0 %v103
    %380 = vmatmul.mubr.f32.gmra.mxu0 %v102
    %v381 = vpop.f32.mrf.mxu0
    %v382 = vadd.f32 %v243, %v381
    %v383 = vpop.f32.mrf.mxu0
    %384 = vmatprep.mubr.f32.mxu0 %v107
    %385 = vmatmul.mubr.f32.gmra.mxu0 %v106
    %v386 = vpop.f32.mrf.mxu0
    %v387 = vadd.f32 %v243, %v386
    %v388 = vpop.f32.mrf.mxu0
    %389 = vmatprep.mubr.f32.mxu0 %v111
    %390 = vmatmul.mubr.f32.gmra.mxu0 %v110
    %v391 = vpop.f32.mrf.mxu0
    %v392 = vadd.f32 %v243, %v391
    %v393 = vpop.f32.mrf.mxu0
    %394 = vmatprep.mubr.f32.mxu0 %v115
    %395 = vmatmul.mubr.f32.gmra.mxu0 %v114
    %v396 = vpop.f32.mrf.mxu0
    %v397 = vadd.f32 %v243, %v396
    %v398 = vpop.f32.mrf.mxu0
    %399 = vmatprep.mubr.f32.mxu0 %v119
    %400 = vmatmul.mubr.f32.gmra.mxu0 %v118
    %v401 = vpop.f32.mrf.mxu0
    %v402 = vadd.f32 %v243, %v401
    %v403 = vpop.f32.mrf.mxu0
    %404 = vmatprep.mubr.f32.mxu0 %v123
    %405 = vmatmul.mubr.f32.gmra.mxu0 %v122
    %v406 = vpop.f32.mrf.mxu0
    %v407 = vadd.f32 %v243, %v406
    %v408 = vpop.f32.mrf.mxu0
    %409 = vmatprep.mubr.f32.mxu0 %v127
    %410 = vmatmul.mubr.f32.gmra.mxu0 %v126
    %v411 = vpop.f32.mrf.mxu0
    %v412 = vadd.f32 %v243, %v411
    %v413 = vpop.f32.mrf.mxu0
    %414 = vmatprep.mubr.f32.mxu0 %v131
    %415 = vmatmul.mubr.f32.gmra.mxu0 %v130
    %v416 = vpop.f32.mrf.mxu0
    %v417 = vadd.f32 %v243, %v416
    %v418 = vpop.f32.mrf.mxu0
    %419 = vmatprep.mubr.f32.mxu0 %v135
    %420 = vmatmul.mubr.f32.gmra.mxu0 %v134
    %v421 = vpop.f32.mrf.mxu0
    %v422 = vadd.f32 %v243, %v421
    %v423 = vpop.f32.mrf.mxu0
    %424 = vmatprep.mubr.f32.mxu0 %v139
    %425 = vmatmul.mubr.f32.gmra.mxu0 %v138
    %v426 = vpop.f32.mrf.mxu0
    %v427 = vadd.f32 %v243, %v426
    %v428 = vpop.f32.mrf.mxu0
    %429 = vmatprep.mubr.f32.mxu0 %v143
    %430 = vmatmul.mubr.f32.gmra.mxu0 %v142
    %v431 = vpop.f32.mrf.mxu0
    %v432 = vadd.f32 %v243, %v431
    %v433 = vpop.f32.mrf.mxu0
    %434 = vmatprep.mubr.f32.mxu0 %v147
    %435 = vmatmul.mubr.f32.gmra.mxu0 %v146
    %v436 = vpop.f32.mrf.mxu0
    %v437 = vadd.f32 %v243, %v436
    %v438 = vpop.f32.mrf.mxu0
    %439 = vmatprep.mubr.f32.mxu0 %v151
    %440 = vmatmul.mubr.f32.gmra.mxu0 %v150
    %v441 = vpop.f32.mrf.mxu0
    %v442 = vadd.f32 %v243, %v441
    %v443 = vpop.f32.mrf.mxu0
    %444 = vmatprep.mubr.f32.mxu0 %v155
    %445 = vmatmul.mubr.f32.gmra.mxu0 %v154
    %v446 = vpop.f32.mrf.mxu0
    %v447 = vadd.f32 %v243, %v446
    %v448 = vpop.f32.mrf.mxu0
    %449 = vmatprep.mubr.f32.mxu0 %v159
    %450 = vmatmul.mubr.f32.gmra.mxu0 %v158
    %v451 = vpop.f32.mrf.mxu0
    %v452 = vadd.f32 %v243, %v451
    %v453 = vpop.f32.mrf.mxu0
    %454 = vmatprep.mubr.f32.mxu0 %v163
    %455 = vmatmul.mubr.f32.gmra.mxu0 %v162
    %v456 = vpop.f32.mrf.mxu0
    %v457 = vadd.f32 %v243, %v456
    %v458 = vpop.f32.mrf.mxu0
    %459 = vmatprep.mubr.f32.mxu0 %v167
    %460 = vmatmul.mubr.f32.gmra.mxu0 %v166
    %v461 = vpop.f32.mrf.mxu0
    %v462 = vadd.f32 %v243, %v461
    %v463 = vpop.f32.mrf.mxu0
    %464 = vmatprep.mubr.f32.mxu0 %v171
    %465 = vmatmul.mubr.f32.gmra.mxu0 %v170
    %v466 = vpop.f32.mrf.mxu0
    %v467 = vadd.f32 %v243, %v466
    %v468 = vpop.f32.mrf.mxu0
    %469 = vdwg.mxu0
    %470 = vmatprep.subr.mxu0 0.0
    %471 = vmatpush1.msra.mxu0 %v221
    %472 = vmatprep.subr.mxu0 0.0
    %473 = vmatpush1.msra.mxu0 %v220
    %474 = vmatprep.subr.mxu0 0.0
    %475 = vmatpush1.msra.mxu0 %v219
    %476 = vmatprep.subr.mxu0 0.0
    %477 = vmatpush1.msra.mxu0 %v218
    %478 = vmatprep.subr.mxu0 0.0
    %479 = vmatpush1.msra.mxu0 %v217
    %480 = vmatprep.subr.mxu0 0.0
    %481 = vmatpush1.msra.mxu0 %v216
    %482 = vmatprep.subr.mxu0 0.0
    %483 = vmatpush1.msra.mxu0 %v215
    %484 = vmatprep.subr.mxu0 0.0
    %485 = vmatpush1.msra.mxu0 %v214
    %486 = vmatprep.subr.mxu0 0.0
    %487 = vmatpush1.msra.mxu0 %v213
    %488 = vmatprep.subr.mxu0 0.0
    %489 = vmatpush1.msra.mxu0 %v212
    %490 = vmatprep.subr.mxu0 0.0
    %491 = vmatpush1.msra.mxu0 %v211
    %492 = vmatprep.subr.mxu0 0.0
    %493 = vmatpush1.msra.mxu0 %v210
    %494 = vmatprep.subr.mxu0 0.0
    %495 = vmatpush1.msra.mxu0 %v209
    %496 = vmatprep.subr.mxu0 0.0
    %497 = vmatpush1.msra.mxu0 %v208
    %498 = vmatprep.subr.mxu0 0.0
    %499 = vmatpush1.msra.mxu0 %v207
    %500 = vmatprep.subr.mxu0 0.0
    %501 = vmatpush1.msra.mxu0 %v206
    %502 = vmatprep.subr.mxu0 0.0
    %503 = vmatpush2.msra.mxu0 %v237
    %504 = vmatprep.subr.mxu0 0.0
    %505 = vmatpush2.msra.mxu0 %v236
    %506 = vmatprep.subr.mxu0 0.0
    %507 = vmatpush2.msra.mxu0 %v235
    %508 = vmatprep.subr.mxu0 0.0
    %509 = vmatpush2.msra.mxu0 %v234
    %510 = vmatprep.subr.mxu0 0.0
    %511 = vmatpush2.msra.mxu0 %v233
    %512 = vmatprep.subr.mxu0 0.0
    %513 = vmatpush2.msra.mxu0 %v232
    %514 = vmatprep.subr.mxu0 0.0
    %515 = vmatpush2.msra.mxu0 %v231
    %516 = vmatprep.subr.mxu0 0.0
    %517 = vmatpush2.msra.mxu0 %v230
    %518 = vmatprep.subr.mxu0 0.0
    %519 = vmatpush2.msra.mxu0 %v229
    %520 = vmatprep.subr.mxu0 0.0
    %521 = vmatpush2.msra.mxu0 %v228
    %522 = vmatprep.subr.mxu0 0.0
    %523 = vmatpush2.msra.mxu0 %v227
    %524 = vmatprep.subr.mxu0 0.0
    %525 = vmatpush2.msra.mxu0 %v226
    %526 = vmatprep.subr.mxu0 0.0
    %527 = vmatpush2.msra.mxu0 %v225
    %528 = vmatprep.subr.mxu0 0.0
    %529 = vmatpush2.msra.mxu0 %v224
    %530 = vmatprep.subr.mxu0 0.0
    %531 = vmatpush2.msra.mxu0 %v223
    %532 = vmatprep.subr.mxu0 0.0
    %533 = vmatpush2.msra.mxu0 %v222
    %534 = vmatprep.mubr.f32.mxu0 %v49
    %535 = vmatmul.mubr.f32.gmra.mxu0 %v48
    %v536 = vpop.f32.mrf.mxu0
    %v537 = vadd.f32 %v312, %v536
    %v538 = vpop.f32.mrf.mxu0
    %539 = vmatprep.mubr.f32.mxu0 %v53
    %540 = vmatmul.mubr.f32.gmra.mxu0 %v52
    %v541 = vpop.f32.mrf.mxu0
    %v542 = vadd.f32 %v317, %v541
    %v543 = vpop.f32.mrf.mxu0
    %544 = vmatprep.mubr.f32.mxu0 %v57
    %545 = vmatmul.mubr.f32.gmra.mxu0 %v56
    %v546 = vpop.f32.mrf.mxu0
    %v547 = vadd.f32 %v322, %v546
    %v548 = vpop.f32.mrf.mxu0
    %549 = vmatprep.mubr.f32.mxu0 %v61
    %550 = vmatmul.mubr.f32.gmra.mxu0 %v60
    %v551 = vpop.f32.mrf.mxu0
    %v552 = vadd.f32 %v327, %v551
    %v553 = vpop.f32.mrf.mxu0
    %554 = vmatprep.mubr.f32.mxu0 %v65
    %555 = vmatmul.mubr.f32.gmra.mxu0 %v64
    %v556 = vpop.f32.mrf.mxu0
    %v557 = vadd.f32 %v332, %v556
    %v558 = vpop.f32.mrf.mxu0
    %559 = vmatprep.mubr.f32.mxu0 %v69
    %560 = vmatmul.mubr.f32.gmra.mxu0 %v68
    %v561 = vpop.f32.mrf.mxu0
    %v562 = vadd.f32 %v337, %v561
    %v563 = vpop.f32.mrf.mxu0
    %564 = vmatprep.mubr.f32.mxu0 %v73
    %565 = vmatmul.mubr.f32.gmra.mxu0 %v72
    %v566 = vpop.f32.mrf.mxu0
    %v567 = vadd.f32 %v342, %v566
    %v568 = vpop.f32.mrf.mxu0
    %569 = vmatprep.mubr.f32.mxu0 %v77
    %570 = vmatmul.mubr.f32.gmra.mxu0 %v76
    %v571 = vpop.f32.mrf.mxu0
    %v572 = vadd.f32 %v347, %v571
    %v573 = vpop.f32.mrf.mxu0
    %574 = vmatprep.mubr.f32.mxu0 %v81
    %575 = vmatmul.mubr.f32.gmra.mxu0 %v80
    %v576 = vpop.f32.mrf.mxu0
    %v577 = vadd.f32 %v352, %v576
    %v578 = vpop.f32.mrf.mxu0
    %579 = vmatprep.mubr.f32.mxu0 %v85
    %580 = vmatmul.mubr.f32.gmra.mxu0 %v84
    %v581 = vpop.f32.mrf.mxu0
    %v582 = vadd.f32 %v357, %v581
    %v583 = vpop.f32.mrf.mxu0
    %584 = vmatprep.mubr.f32.mxu0 %v89
    %585 = vmatmul.mubr.f32.gmra.mxu0 %v88
    %v586 = vpop.f32.mrf.mxu0
    %v587 = vadd.f32 %v362, %v586
    %v588 = vpop.f32.mrf.mxu0
    %589 = vmatprep.mubr.f32.mxu0 %v93
    %590 = vmatmul.mubr.f32.gmra.mxu0 %v92
    %v591 = vpop.f32.mrf.mxu0
    %v592 = vadd.f32 %v367, %v591
    %v593 = vpop.f32.mrf.mxu0
    %594 = vmatprep.mubr.f32.mxu0 %v97
    %595 = vmatmul.mubr.f32.gmra.mxu0 %v96
    %v596 = vpop.f32.mrf.mxu0
    %v597 = vadd.f32 %v372, %v596
    %v598 = vpop.f32.mrf.mxu0
    %599 = vmatprep.mubr.f32.mxu0 %v101
    %600 = vmatmul.mubr.f32.gmra.mxu0 %v100
    %v601 = vpop.f32.mrf.mxu0
    %v602 = vadd.f32 %v377, %v601
    %v603 = vpop.f32.mrf.mxu0
    %604 = vmatprep.mubr.f32.mxu0 %v105
    %605 = vmatmul.mubr.f32.gmra.mxu0 %v104
    %v606 = vpop.f32.mrf.mxu0
    %v607 = vadd.f32 %v382, %v606
    %v608 = vpop.f32.mrf.mxu0
    %609 = vmatprep.mubr.f32.mxu0 %v109
    %610 = vmatmul.mubr.f32.gmra.mxu0 %v108
    %v611 = vpop.f32.mrf.mxu0
    %v612 = vadd.f32 %v387, %v611
    %v613 = vpop.f32.mrf.mxu0
    %614 = vmatprep.mubr.f32.mxu0 %v113
    %615 = vmatmul.mubr.f32.gmra.mxu0 %v112
    %v616 = vpop.f32.mrf.mxu0
    %v617 = vadd.f32 %v392, %v616
    %v618 = vpop.f32.mrf.mxu0
    %619 = vmatprep.mubr.f32.mxu0 %v117
    %620 = vmatmul.mubr.f32.gmra.mxu0 %v116
    %v621 = vpop.f32.mrf.mxu0
    %v622 = vadd.f32 %v397, %v621
    %v623 = vpop.f32.mrf.mxu0
    %624 = vmatprep.mubr.f32.mxu0 %v121
    %625 = vmatmul.mubr.f32.gmra.mxu0 %v120
    %v626 = vpop.f32.mrf.mxu0
    %v627 = vadd.f32 %v402, %v626
    %v628 = vpop.f32.mrf.mxu0
    %629 = vmatprep.mubr.f32.mxu0 %v125
    %630 = vmatmul.mubr.f32.gmra.mxu0 %v124
    %v631 = vpop.f32.mrf.mxu0
    %v632 = vadd.f32 %v407, %v631
    %v633 = vpop.f32.mrf.mxu0
    %634 = vmatprep.mubr.f32.mxu0 %v129
    %635 = vmatmul.mubr.f32.gmra.mxu0 %v128
    %v636 = vpop.f32.mrf.mxu0
    %v637 = vadd.f32 %v412, %v636
    %v638 = vpop.f32.mrf.mxu0
    %639 = vmatprep.mubr.f32.mxu0 %v133
    %640 = vmatmul.mubr.f32.gmra.mxu0 %v132
    %v641 = vpop.f32.mrf.mxu0
    %v642 = vadd.f32 %v417, %v641
    %v643 = vpop.f32.mrf.mxu0
    %644 = vmatprep.mubr.f32.mxu0 %v137
    %645 = vmatmul.mubr.f32.gmra.mxu0 %v136
    %v646 = vpop.f32.mrf.mxu0
    %v647 = vadd.f32 %v422, %v646
    %v648 = vpop.f32.mrf.mxu0
    %649 = vmatprep.mubr.f32.mxu0 %v141
    %650 = vmatmul.mubr.f32.gmra.mxu0 %v140
    %v651 = vpop.f32.mrf.mxu0
    %v652 = vadd.f32 %v427, %v651
    %v653 = vpop.f32.mrf.mxu0
    %654 = vmatprep.mubr.f32.mxu0 %v145
    %655 = vmatmul.mubr.f32.gmra.mxu0 %v144
    %v656 = vpop.f32.mrf.mxu0
    %v657 = vadd.f32 %v432, %v656
    %v658 = vpop.f32.mrf.mxu0
    %659 = vmatprep.mubr.f32.mxu0 %v149
    %660 = vmatmul.mubr.f32.gmra.mxu0 %v148
    %v661 = vpop.f32.mrf.mxu0
    %v662 = vadd.f32 %v437, %v661
    %v663 = vpop.f32.mrf.mxu0
    %664 = vmatprep.mubr.f32.mxu0 %v153
    %665 = vmatmul.mubr.f32.gmra.mxu0 %v152
    %v666 = vpop.f32.mrf.mxu0
    %v667 = vadd.f32 %v442, %v666
    %v668 = vpop.f32.mrf.mxu0
    %669 = vmatprep.mubr.f32.mxu0 %v157
    %670 = vmatmul.mubr.f32.gmra.mxu0 %v156
    %v671 = vpop.f32.mrf.mxu0
    %v672 = vadd.f32 %v447, %v671
    %v673 = vpop.f32.mrf.mxu0
    %674 = vmatprep.mubr.f32.mxu0 %v161
    %675 = vmatmul.mubr.f32.gmra.mxu0 %v160
    %v676 = vpop.f32.mrf.mxu0
    %v677 = vadd.f32 %v452, %v676
    %v678 = vpop.f32.mrf.mxu0
    %679 = vmatprep.mubr.f32.mxu0 %v165
    %680 = vmatmul.mubr.f32.gmra.mxu0 %v164
    %v681 = vpop.f32.mrf.mxu0
    %v682 = vadd.f32 %v457, %v681
    %v683 = vpop.f32.mrf.mxu0
    %684 = vmatprep.mubr.f32.mxu0 %v169
    %685 = vmatmul.mubr.f32.gmra.mxu0 %v168
    %v686 = vpop.f32.mrf.mxu0
    %v687 = vadd.f32 %v462, %v686
    %v688 = vpop.f32.mrf.mxu0
    %689 = vmatprep.mubr.f32.mxu0 %v173
    %690 = vmatmul.mubr.f32.gmra.mxu0 %v172
    %v691 = vpop.f32.mrf.mxu0
    %v692 = vadd.f32 %v467, %v691
    %v693 = vpop.f32.mrf.mxu0
    %694 = vdwg.mxu0
    %v695 = vtanh.pop %v537
    %v696 = vtanh.pop %v542
    %v697 = vtanh.pop %v547
    %v698 = vtanh.pop %v552
    %v699 = vtanh.pop %v557
    %v700 = vtanh.pop %v562
    %v701 = vtanh.pop %v567
    %v702 = vtanh.pop %v572
    %v703 = vtanh.pop %v577
    %v704 = vtanh.pop %v582
    %v705 = vtanh.pop %v587
    %v706 = vtanh.pop %v592
    %v707 = vtanh.pop %v597
    %v708 = vtanh.pop %v602
    %v709 = vtanh.pop %v607
    %v710 = vtanh.pop %v612
    %v711 = vtanh.pop %v617
    %v712 = vtanh.pop %v622
    %v713 = vtanh.pop %v627
    %v714 = vtanh.pop %v632
    %v715 = vtanh.pop %v637
    %v716 = vtanh.pop %v642
    %v717 = vtanh.pop %v647
    %v718 = vtanh.pop %v652
    %v719 = vtanh.pop %v657
    %v720 = vtanh.pop %v662
    %v721 = vtanh.pop %v667
    %v722 = vtanh.pop %v672
    %v723 = vtanh.pop %v677
    %v724 = vtanh.pop %v682
    %v725 = vtanh.pop %v687
    %v726 = vtanh.pop %v692
    %v727 = vadd.f32 %v695, %v696
    %v728 = vadd.f32 %v727, %v697
    %v729 = vadd.f32 %v728, %v698
    %v730 = vadd.f32 %v729, %v699
    %v731 = vadd.f32 %v730, %v700
    %v732 = vadd.f32 %v731, %v701
    %v733 = vadd.f32 %v732, %v702
    %v734 = vadd.f32 %v733, %v703
    %v735 = vadd.f32 %v734, %v704
    %v736 = vadd.f32 %v735, %v705
    %v737 = vadd.f32 %v736, %v706
    %v738 = vadd.f32 %v737, %v707
    %v739 = vadd.f32 %v738, %v708
    %v740 = vadd.f32 %v739, %v709
    %v741 = vadd.f32 %v740, %v710
    %v742 = vadd.f32 %v741, %v711
    %v743 = vadd.f32 %v742, %v712
    %v744 = vadd.f32 %v743, %v713
    %v745 = vadd.f32 %v744, %v714
    %v746 = vadd.f32 %v745, %v715
    %v747 = vadd.f32 %v746, %v716
    %v748 = vadd.f32 %v747, %v717
    %v749 = vadd.f32 %v748, %v718
    %v750 = vadd.f32 %v749, %v719
    %v751 = vadd.f32 %v750, %v720
    %v752 = vadd.f32 %v751, %v721
    %v753 = vadd.f32 %v752, %v722
    %v754 = vadd.f32 %v753, %v723
    %v755 = vadd.f32 %v754, %v724
    %v756 = vadd.f32 %v755, %v725
    %v757 = vadd.f32 %v756, %v726
    %v758 = vrot.slane %v757, 4
    %v759 = vadd.f32 %v757, %v758
    %v760 = vrot.slane %v759, 2
    %v761 = vadd.f32 %v759, %v760
    %v762 = vrot.slane %v761, 1
    %v763 = vadd.f32 %v761, %v762
    %v764 = vmul.f32 %v763, 0.00390625
    %v765 = vld [vmem:[%s3] sm:$0x1]
    %v766 = vmul.f32 %v764, %v765
    %vm767 = vcmask 253952
    %v768 = vsel %vm767, %v766, 0.0
    %769 = vadd.xlane.f32.xlu0 %v768
    %v770 = vpop.xlane.xlu0 %769
    %v771 = vrot.slane %v770, 4
    %v772 = vadd.f32 %v770, %v771
    %v773 = vrot.slane %v772, 2
    %v774 = vadd.f32 %v772, %v773
    %v775 = vrot.slane %v774, 1
    %v776 = vadd.f32 %v774, %v775
    %s777 = vtos %v776
    %v778 = vstv %s777
    %780 = vrot.lane.b32.xlu0 %v766, 96
    %v781 = vpop.permute.xlu0 %780
    %v783 = vsel %vm767, %v781, 0.0
    %784 = vadd.xlane.f32.xlu0 %v783
    %v785 = vpop.xlane.xlu0 %784
    %v786 = vrot.slane %v785, 4
    %v787 = vadd.f32 %v785, %v786
    %v788 = vrot.slane %v787, 2
    %v789 = vadd.f32 %v787, %v788
    %v790 = vrot.slane %v789, 1
    %v791 = vadd.f32 %v789, %v790
    %s792 = vtos %v791
    %v793 = vstv %s792
    %794 = vrot.lane.b32.xlu0 %v766, 64
    %v795 = vpop.permute.xlu0 %794
    %v797 = vsel %vm767, %v795, 0.0
    %798 = vadd.xlane.f32.xlu0 %v797
    %v799 = vpop.xlane.xlu0 %798
    %v800 = vrot.slane %v799, 4
    %v801 = vadd.f32 %v799, %v800
    %v802 = vrot.slane %v801, 2
    %v803 = vadd.f32 %v801, %v802
    %v804 = vrot.slane %v803, 1
    %v805 = vadd.f32 %v803, %v804
    %s806 = vtos %v805
    %v807 = vstv %s806
    %808 = vrot.lane.b32.xlu0 %v766, 32
    %v809 = vpop.permute.xlu0 %808
    %v811 = vsel %vm767, %v809, 0.0
    %812 = vadd.xlane.f32.xlu0 %v811
    %v813 = vpop.xlane.xlu0 %812
    %v814 = vrot.slane %v813, 4
    %v815 = vadd.f32 %v813, %v814
    %v816 = vrot.slane %v815, 2
    %v817 = vadd.f32 %v815, %v816
    %v818 = vrot.slane %v817, 1
    %v819 = vadd.f32 %v817, %v818
    %s820 = vtos %v819
    %v821 = vstv %s820
    %v822 = vmax.f32 %v778, %v793
    %v823 = vmax.f32 %v822, %v807
    %v824 = vmax.f32 %v823, %v821
    %v825 = vsub.f32 %v778, %v824
    %v826 = vmul.f32 %v825, 1.442695
    %v827 = vpow.pop %v826
    %v828 = vsub.f32 %v793, %v824
    %v829 = vmul.f32 %v828, 1.442695
    %v830 = vpow.pop %v829
    %v831 = vsub.f32 %v807, %v824
    %v832 = vmul.f32 %v831, 1.442695
    %v833 = vpow.pop %v832
    %v834 = vsub.f32 %v821, %v824
    %v835 = vmul.f32 %v834, 1.442695
    %v836 = vpow.pop %v835
    %v837 = vadd.f32 %v827, %v830
    %v838 = vadd.f32 %v837, %v833
    %v839 = vadd.f32 %v838, %v836
    %v840 = vrcp.pop %v839
    %v841 = vmul.f32 1.0, %v840
    %v842 = vmul.f32 %v827, %v841
    %v843 = vmul.f32 %v46, %v842
    %v844 = vmul.f32 %v50, %v842
    %v845 = vmul.f32 %v54, %v842
    %v846 = vmul.f32 %v58, %v842
    %v847 = vmul.f32 %v62, %v842
    %v848 = vmul.f32 %v66, %v842
    %v849 = vmul.f32 %v70, %v842
    %v850 = vmul.f32 %v74, %v842
    %v851 = vmul.f32 %v78, %v842
    %v852 = vmul.f32 %v82, %v842
    %v853 = vmul.f32 %v86, %v842
    %v854 = vmul.f32 %v90, %v842
    %v855 = vmul.f32 %v94, %v842
    %v856 = vmul.f32 %v98, %v842
    %v857 = vmul.f32 %v102, %v842
    %v858 = vmul.f32 %v106, %v842
    %v859 = vmul.f32 %v110, %v842
    %v860 = vmul.f32 %v114, %v842
    %v861 = vmul.f32 %v118, %v842
    %v862 = vmul.f32 %v122, %v842
    %v863 = vmul.f32 %v126, %v842
    %v864 = vmul.f32 %v130, %v842
    %v865 = vmul.f32 %v134, %v842
    %v866 = vmul.f32 %v138, %v842
    %v867 = vmul.f32 %v142, %v842
    %v868 = vmul.f32 %v146, %v842
    %v869 = vmul.f32 %v150, %v842
    %v870 = vmul.f32 %v154, %v842
    %v871 = vmul.f32 %v158, %v842
    %v872 = vmul.f32 %v162, %v842
    %v873 = vmul.f32 %v166, %v842
    %v874 = vmul.f32 %v170, %v842
    %v875 = vmul.f32 %v830, %v841
    %v876 = vmul.f32 %v47, %v875
    %v877 = vmul.f32 %v51, %v875
    %v878 = vmul.f32 %v55, %v875
    %v879 = vmul.f32 %v59, %v875
    %v880 = vmul.f32 %v63, %v875
    %v881 = vmul.f32 %v67, %v875
    %v882 = vmul.f32 %v71, %v875
    %v883 = vmul.f32 %v75, %v875
    %v884 = vmul.f32 %v79, %v875
    %v885 = vmul.f32 %v83, %v875
    %v886 = vmul.f32 %v87, %v875
    %v887 = vmul.f32 %v91, %v875
    %v888 = vmul.f32 %v95, %v875
    %v889 = vmul.f32 %v99, %v875
    %v890 = vmul.f32 %v103, %v875
    %v891 = vmul.f32 %v107, %v875
    %v892 = vmul.f32 %v111, %v875
    %v893 = vmul.f32 %v115, %v875
    %v894 = vmul.f32 %v119, %v875
    %v895 = vmul.f32 %v123, %v875
    %v896 = vmul.f32 %v127, %v875
    %v897 = vmul.f32 %v131, %v875
    %v898 = vmul.f32 %v135, %v875
    %v899 = vmul.f32 %v139, %v875
    %v900 = vmul.f32 %v143, %v875
    %v901 = vmul.f32 %v147, %v875
    %v902 = vmul.f32 %v151, %v875
    %v903 = vmul.f32 %v155, %v875
    %v904 = vmul.f32 %v159, %v875
    %v905 = vmul.f32 %v163, %v875
    %v906 = vmul.f32 %v167, %v875
    %v907 = vmul.f32 %v171, %v875
    %v908 = vadd.f32 %v843, %v876
    %v909 = vadd.f32 %v844, %v877
    %v910 = vadd.f32 %v845, %v878
    %v911 = vadd.f32 %v846, %v879
    %v912 = vadd.f32 %v847, %v880
    %v913 = vadd.f32 %v848, %v881
    %v914 = vadd.f32 %v849, %v882
    %v915 = vadd.f32 %v850, %v883
    %v916 = vadd.f32 %v851, %v884
    %v917 = vadd.f32 %v852, %v885
    %v918 = vadd.f32 %v853, %v886
    %v919 = vadd.f32 %v854, %v887
    %v920 = vadd.f32 %v855, %v888
    %v921 = vadd.f32 %v856, %v889
    %v922 = vadd.f32 %v857, %v890
    %v923 = vadd.f32 %v858, %v891
    %v924 = vadd.f32 %v859, %v892
    %v925 = vadd.f32 %v860, %v893
    %v926 = vadd.f32 %v861, %v894
    %v927 = vadd.f32 %v862, %v895
    %v928 = vadd.f32 %v863, %v896
    %v929 = vadd.f32 %v864, %v897
    %v930 = vadd.f32 %v865, %v898
    %v931 = vadd.f32 %v866, %v899
    %v932 = vadd.f32 %v867, %v900
    %v933 = vadd.f32 %v868, %v901
    %v934 = vadd.f32 %v869, %v902
    %v935 = vadd.f32 %v870, %v903
    %v936 = vadd.f32 %v871, %v904
    %v937 = vadd.f32 %v872, %v905
    %v938 = vadd.f32 %v873, %v906
    %v939 = vadd.f32 %v874, %v907
    %v940 = vmul.f32 %v833, %v841
    %v941 = vmul.f32 %v48, %v940
    %v942 = vmul.f32 %v52, %v940
    %v943 = vmul.f32 %v56, %v940
    %v944 = vmul.f32 %v60, %v940
    %v945 = vmul.f32 %v64, %v940
    %v946 = vmul.f32 %v68, %v940
    %v947 = vmul.f32 %v72, %v940
    %v948 = vmul.f32 %v76, %v940
    %v949 = vmul.f32 %v80, %v940
    %v950 = vmul.f32 %v84, %v940
    %v951 = vmul.f32 %v88, %v940
    %v952 = vmul.f32 %v92, %v940
    %v953 = vmul.f32 %v96, %v940
    %v954 = vmul.f32 %v100, %v940
    %v955 = vmul.f32 %v104, %v940
    %v956 = vmul.f32 %v108, %v940
    %v957 = vmul.f32 %v112, %v940
    %v958 = vmul.f32 %v116, %v940
    %v959 = vmul.f32 %v120, %v940
    %v960 = vmul.f32 %v124, %v940
    %v961 = vmul.f32 %v128, %v940
    %v962 = vmul.f32 %v132, %v940
    %v963 = vmul.f32 %v136, %v940
    %v964 = vmul.f32 %v140, %v940
    %v965 = vmul.f32 %v144, %v940
    %v966 = vmul.f32 %v148, %v940
    %v967 = vmul.f32 %v152, %v940
    %v968 = vmul.f32 %v156, %v940
    %v969 = vmul.f32 %v160, %v940
    %v970 = vmul.f32 %v164, %v940
    %v971 = vmul.f32 %v168, %v940
    %v972 = vmul.f32 %v172, %v940
    %v973 = vadd.f32 %v908, %v941
    %v974 = vadd.f32 %v909, %v942
    %v975 = vadd.f32 %v910, %v943
    %v976 = vadd.f32 %v911, %v944
    %v977 = vadd.f32 %v912, %v945
    %v978 = vadd.f32 %v913, %v946
    %v979 = vadd.f32 %v914, %v947
    %v980 = vadd.f32 %v915, %v948
    %v981 = vadd.f32 %v916, %v949
    %v982 = vadd.f32 %v917, %v950
    %v983 = vadd.f32 %v918, %v951
    %v984 = vadd.f32 %v919, %v952
    %v985 = vadd.f32 %v920, %v953
    %v986 = vadd.f32 %v921, %v954
    %v987 = vadd.f32 %v922, %v955
    %v988 = vadd.f32 %v923, %v956
    %v989 = vadd.f32 %v924, %v957
    %v990 = vadd.f32 %v925, %v958
    %v991 = vadd.f32 %v926, %v959
    %v992 = vadd.f32 %v927, %v960
    %v993 = vadd.f32 %v928, %v961
    %v994 = vadd.f32 %v929, %v962
    %v995 = vadd.f32 %v930, %v963
    %v996 = vadd.f32 %v931, %v964
    %v997 = vadd.f32 %v932, %v965
    %v998 = vadd.f32 %v933, %v966
    %v999 = vadd.f32 %v934, %v967
    %v1000 = vadd.f32 %v935, %v968
    %v1001 = vadd.f32 %v936, %v969
    %v1002 = vadd.f32 %v937, %v970
    %v1003 = vadd.f32 %v938, %v971
    %v1004 = vadd.f32 %v939, %v972
    %v1005 = vmul.f32 %v836, %v841
    %v1006 = vmul.f32 %v49, %v1005
    %v1007 = vmul.f32 %v53, %v1005
    %v1008 = vmul.f32 %v57, %v1005
    %v1009 = vmul.f32 %v61, %v1005
    %v1010 = vmul.f32 %v65, %v1005
    %v1011 = vmul.f32 %v69, %v1005
    %v1012 = vmul.f32 %v73, %v1005
    %v1013 = vmul.f32 %v77, %v1005
    %v1014 = vmul.f32 %v81, %v1005
    %v1015 = vmul.f32 %v85, %v1005
    %v1016 = vmul.f32 %v89, %v1005
    %v1017 = vmul.f32 %v93, %v1005
    %v1018 = vmul.f32 %v97, %v1005
    %v1019 = vmul.f32 %v101, %v1005
    %v1020 = vmul.f32 %v105, %v1005
    %v1021 = vmul.f32 %v109, %v1005
    %v1022 = vmul.f32 %v113, %v1005
    %v1023 = vmul.f32 %v117, %v1005
    %v1024 = vmul.f32 %v121, %v1005
    %v1025 = vmul.f32 %v125, %v1005
    %v1026 = vmul.f32 %v129, %v1005
    %v1027 = vmul.f32 %v133, %v1005
    %v1028 = vmul.f32 %v137, %v1005
    %v1029 = vmul.f32 %v141, %v1005
    %v1030 = vmul.f32 %v145, %v1005
    %v1031 = vmul.f32 %v149, %v1005
    %v1032 = vmul.f32 %v153, %v1005
    %v1033 = vmul.f32 %v157, %v1005
    %v1034 = vmul.f32 %v161, %v1005
    %v1035 = vmul.f32 %v165, %v1005
    %v1036 = vmul.f32 %v169, %v1005
    %v1037 = vmul.f32 %v173, %v1005
    %v1038 = vadd.f32 %v973, %v1006
    %v1039 = vadd.f32 %v974, %v1007
    %v1040 = vadd.f32 %v975, %v1008
    %v1041 = vadd.f32 %v976, %v1009
    %v1042 = vadd.f32 %v977, %v1010
    %v1043 = vadd.f32 %v978, %v1011
    %v1044 = vadd.f32 %v979, %v1012
    %v1045 = vadd.f32 %v980, %v1013
    %v1046 = vadd.f32 %v981, %v1014
    %v1047 = vadd.f32 %v982, %v1015
    %v1048 = vadd.f32 %v983, %v1016
    %v1049 = vadd.f32 %v984, %v1017
    %v1050 = vadd.f32 %v985, %v1018
    %v1051 = vadd.f32 %v986, %v1019
    %v1052 = vadd.f32 %v987, %v1020
    %v1053 = vadd.f32 %v988, %v1021
    %v1054 = vadd.f32 %v989, %v1022
    %v1055 = vadd.f32 %v990, %v1023
    %v1056 = vadd.f32 %v991, %v1024
    %v1057 = vadd.f32 %v992, %v1025
    %v1058 = vadd.f32 %v993, %v1026
    %v1059 = vadd.f32 %v994, %v1027
    %v1060 = vadd.f32 %v995, %v1028
    %v1061 = vadd.f32 %v996, %v1029
    %v1062 = vadd.f32 %v997, %v1030
    %v1063 = vadd.f32 %v998, %v1031
    %v1064 = vadd.f32 %v999, %v1032
    %v1065 = vadd.f32 %v1000, %v1033
    %v1066 = vadd.f32 %v1001, %v1034
    %v1067 = vadd.f32 %v1002, %v1035
    %v1068 = vadd.f32 %v1003, %v1036
    %v1069 = vadd.f32 %v1004, %v1037
    %1070 = vst [vmem:[#allocation7] sm:$0xff] %v1038
    %1071 = vst [vmem:[#allocation7 + $0x8] sm:$0xff] %v1039
    %1072 = vst [vmem:[#allocation7 + $0x10] sm:$0xff] %v1040
    %1073 = vst [vmem:[#allocation7 + $0x18] sm:$0xff] %v1041
    %1074 = vst [vmem:[#allocation7 + $0x20] sm:$0xff] %v1042
    %1075 = vst [vmem:[#allocation7 + $0x28] sm:$0xff] %v1043
    %1076 = vst [vmem:[#allocation7 + $0x30] sm:$0xff] %v1044
    %1077 = vst [vmem:[#allocation7 + $0x38] sm:$0xff] %v1045
    %1078 = vst [vmem:[#allocation7 + $0x40] sm:$0xff] %v1046
    %1079 = vst [vmem:[#allocation7 + $0x48] sm:$0xff] %v1047
    %1080 = vst [vmem:[#allocation7 + $0x50] sm:$0xff] %v1048
    %1081 = vst [vmem:[#allocation7 + $0x58] sm:$0xff] %v1049
    %1082 = vst [vmem:[#allocation7 + $0x60] sm:$0xff] %v1050
    %1083 = vst [vmem:[#allocation7 + $0x68] sm:$0xff] %v1051
    %1084 = vst [vmem:[#allocation7 + $0x70] sm:$0xff] %v1052
    %1085 = vst [vmem:[#allocation7 + $0x78] sm:$0xff] %v1053
    %1086 = vst [vmem:[#allocation7 + $0x80] sm:$0xff] %v1054
    %1087 = vst [vmem:[#allocation7 + $0x88] sm:$0xff] %v1055
    %1088 = vst [vmem:[#allocation7 + $0x90] sm:$0xff] %v1056
    %1089 = vst [vmem:[#allocation7 + $0x98] sm:$0xff] %v1057
    %1090 = vst [vmem:[#allocation7 + $0xa0] sm:$0xff] %v1058
    %1091 = vst [vmem:[#allocation7 + $0xa8] sm:$0xff] %v1059
    %1092 = vst [vmem:[#allocation7 + $0xb0] sm:$0xff] %v1060
    %1093 = vst [vmem:[#allocation7 + $0xb8] sm:$0xff] %v1061
    %1094 = vst [vmem:[#allocation7 + $0xc0] sm:$0xff] %v1062
    %1095 = vst [vmem:[#allocation7 + $0xc8] sm:$0xff] %v1063
    %1096 = vst [vmem:[#allocation7 + $0xd0] sm:$0xff] %v1064
    %1097 = vst [vmem:[#allocation7 + $0xd8] sm:$0xff] %v1065
    %1098 = vst [vmem:[#allocation7 + $0xe0] sm:$0xff] %v1066
    %1099 = vst [vmem:[#allocation7 + $0xe8] sm:$0xff] %v1067
    %1100 = vst [vmem:[#allocation7 + $0xf0] sm:$0xff] %v1068
    %1101 = vst [vmem:[#allocation7 + $0xf8] sm:$0xff] %v1069
    // Predicated region
    $region26: #{tpu_custom_call.1} parent=1 // pred_check
      _
    $region27: #{tpu_custom_call.1} parent=1 // pred_check_branch
      %1103 = sbr.rel (0) target = $region29
    $region28: #{tpu_custom_call.1} parent=1 // pred_region
      %s1105 = ssub.s32 4096, 4096
      %1106 = vsyncadd [#allocation4], %s1105
      %s1107 = sshll.u32 [#allocation7], 4
      %s1108 = int_to_ptr.vmem [resolvable:$true] %s1107
      %1113 = dma.vmem_to_hbm [thread:$0]  %s1108, 4096, %s4, [#allocation4], 128, 128, 8
    $region29: #{tpu_custom_call.1} parent=1 // pred_fallthru
      _
    // Predicated region
    $region30: #{tpu_custom_call.1} parent=1 // pred_check
      _
    $region31: #{tpu_custom_call.1} parent=1 // pred_check_branch
      %1115 = sbr.rel (0) target = $region33
    $region32: #{tpu_custom_call.1} parent=1 // pred_region
      %1116 = dma.done [#allocation4], 4096
    $region33: #{tpu_custom_call.1} parent=1 // pred_fallthru
      _
    %1117 = vsyncpa [#allocation3], 1
    %1118 = vsyncpa [#allocation6], 1
    %1119 = vsyncpa [#allocation4], 1

</llo_original>
